<compile_context>
chip_gen: v7x
topology: tpu7x:2x2x1
jax: 0.10.0
libtpu: 0.0.40
codegen_flags: <defaults>
</compile_context>

<pallas_src>
import functools

import jax
import jax.numpy as jnp
from jax.experimental import pallas as pl
from jax.experimental.pallas import tpu as pltpu

EPS = 1e-5


# --------------------------------------------------------------------------- #
# Phase 1: per-channel sum / sum-of-squares (accumulator over N-row tiles)
# --------------------------------------------------------------------------- #
def bn_stats_kernel(x_ref, sum_ref, sumsq_ref):
    i = pl.program_id(0)

    @pl.when(i == 0)
    def _():
        sum_ref[...] = jnp.zeros_like(sum_ref)
        sumsq_ref[...] = jnp.zeros_like(sumsq_ref)

    x = x_ref[...].astype(jnp.float32)
    sum_ref[...] += jnp.sum(x, axis=0, keepdims=True)
    sumsq_ref[...] += jnp.sum(x * x, axis=0, keepdims=True)


# --------------------------------------------------------------------------- #
# Phase 2: normalize + Linear(size, size) + dropout + residual
# --------------------------------------------------------------------------- #
def _dropout_keep_scale(shape, row0, seed_u32, dropout_p):
    """Per-element keep/scale factor from a splitmix32 hash of the global index."""
    rows, cols = shape
    r = jax.lax.broadcasted_iota(jnp.int32, shape, 0)
    c = jax.lax.broadcasted_iota(jnp.int32, shape, 1)
    u = ((r + row0) * jnp.int32(cols) + c).astype(jnp.uint32)
    u = u * jnp.uint32(0x9E3779B9) + seed_u32
    u = (u ^ (u >> jnp.uint32(16))) * jnp.uint32(0x7FEB352D)
    u = (u ^ (u >> jnp.uint32(15))) * jnp.uint32(0x846CA68B)
    u = u ^ (u >> jnp.uint32(16))
    threshold = jnp.uint32(min(int(dropout_p * 4294967296.0), 4294967295))
    inv_keep = jnp.float32(1.0 / (1.0 - dropout_p))
    return jnp.where(u >= threshold, inv_keep, jnp.float32(0.0))


def bn_apply_kernel(seed_ref, x_ref, scale_ref, shift_ref, w_ref, b_ref, o_ref,
                    *, dropout_p, tile_n):
    x = x_ref[...].astype(jnp.float32)

    # Fused BatchNorm affine: xn = x * scale + shift  (scale/shift fold gamma/beta/mean/var)
    xn = x * scale_ref[...] + shift_ref[...]

    # sublayer(x) = Linear(size, size) on the MXU; bf16 inputs, f32 accumulation.
    s = jnp.dot(xn.astype(jnp.bfloat16), w_ref[...],
                preferred_element_type=jnp.float32)
    s = s + b_ref[...]

    # Train-mode dropout: integer-threshold compare, single select-multiply.
    if dropout_p > 0.0:
        row0 = pl.program_id(0) * tile_n
        seed_u32 = seed_ref[0].astype(jnp.uint32)
        s = s * _dropout_keep_scale(s.shape, row0, seed_u32, dropout_p)

    # Residual: the PyTorch module adds the NORMALIZED activation (x was reassigned).
    o_ref[...] = (xn + s).astype(o_ref.dtype)


# --------------------------------------------------------------------------- #
# Wrapper
# --------------------------------------------------------------------------- #
def _pick_tile_n(n, target=512):
    """Largest row tile <= target that is a multiple of 8 and divides N; else N."""
    if n <= target:
        return n
    t = (target // 8) * 8
    while t >= 8:
        if n % t == 0:
            return t
        t -= 8
    return n


def sublayer_connection(x, w, b, gamma, beta, seed, *, dropout_p,
                        tile_n_target=512):
    """x: (B, S, C); w: (C, C); b/gamma/beta: (1, C); seed: int32[1]."""
    B, S, C = x.shape
    N = B * S
    x2 = x.reshape(N, C)

    tile_n = _pick_tile_n(N, tile_n_target)
    grid_n = N // tile_n

    # ---------- phase 1: channel-wise sum / sum-of-squares ----------
    sums, sumsqs = pl.pallas_call(
        bn_stats_kernel,
        out_shape=(jax.ShapeDtypeStruct((1, C), jnp.float32),
                   jax.ShapeDtypeStruct((1, C), jnp.float32)),
        grid_spec=pltpu.PrefetchScalarGridSpec(
            num_scalar_prefetch=0,
            grid=(grid_n,),
            in_specs=[pl.BlockSpec((tile_n, C), lambda i: (i, 0))],
            out_specs=(pl.BlockSpec((1, C), lambda i: (0, 0)),
                       pl.BlockSpec((1, C), lambda i: (0, 0))),
        ),
        compiler_params=pltpu.CompilerParams(
            dimension_semantics=("arbitrary",)),
    )(x2)

    # ---------- tiny (1, C) finalize in XLA: fold affine into scale/shift ----------
    mean = sums / N
    var = jnp.maximum(sumsqs / N - mean * mean, 0.0)   # biased variance (BatchNorm1d)
    scale = gamma * jax.lax.rsqrt(var + EPS)
    shift = beta - mean * scale

    # ---------- phase 2: normalize + linear + dropout + residual ----------
    kernel = functools.partial(bn_apply_kernel, dropout_p=dropout_p, tile_n=tile_n)
    out = pl.pallas_call(
        kernel,
        out_shape=jax.ShapeDtypeStruct((N, C), x.dtype),
        grid_spec=pltpu.PrefetchScalarGridSpec(
            num_scalar_prefetch=1,          # seed lives in SMEM
            grid=(grid_n,),
            in_specs=[
                pl.BlockSpec((tile_n, C), lambda i, seed: (i, 0)),  # x tile
                pl.BlockSpec((1, C), lambda i, seed: (0, 0)),       # scale (resident)
                pl.BlockSpec((1, C), lambda i, seed: (0, 0)),       # shift (resident)
                pl.BlockSpec((C, C), lambda i, seed: (0, 0)),       # W (resident, bf16)
                pl.BlockSpec((1, C), lambda i, seed: (0, 0)),       # bias (resident)
            ],
            out_specs=pl.BlockSpec((tile_n, C), lambda i, seed: (i, 0)),
        ),
        compiler_params=pltpu.CompilerParams(
            dimension_semantics=("parallel",)),
    )(seed, x2, scale, shift, w.astype(jnp.bfloat16), b)

    return out.reshape(B, S, C)


# --------------------------------------------------------------------------- #
# Pure-JAX reference (dropout disabled) for a quick self-check
# --------------------------------------------------------------------------- #
def _reference_no_dropout(x, w, b, gamma, beta):
    B, S, C = x.shape
    x2 = x.reshape(-1, C).astype(jnp.float32)
    mean = jnp.mean(x2, axis=0, keepdims=True)
    var = jnp.mean((x2 - mean) ** 2, axis=0, keepdims=True)
    xn = (x2 - mean) * jax.lax.rsqrt(var + EPS) * gamma + beta
    s = jnp.dot(xn.astype(jnp.bfloat16), w.astype(jnp.bfloat16),
                preferred_element_type=jnp.float32) + b
    return (xn + s).reshape(B, S, C)


if __name__ == "__main__":
    B, S, C = 2, 8, 32          # batch, seq, size
    dropout_p = 0.1

    key = jax.random.PRNGKey(0)
    kx, kw = jax.random.split(key)

    x = jax.random.normal(kx, (B, S, C), dtype=jnp.float32)

    # Deterministic parameter init:
    #   BatchNorm1d affine: gamma=1, beta=0 (PyTorch default init)
    gamma = jnp.ones((1, C), dtype=jnp.float32)
    beta = jnp.zeros((1, C), dtype=jnp.float32)
    #   sublayer = Linear(size, size)
    w = jax.random.normal(kw, (C, C), dtype=jnp.float32) * (1.0 / C ** 0.5)
    b = jnp.zeros((1, C), dtype=jnp.float32)

    seed = jnp.array([0], dtype=jnp.int32)

    # Self-check against a pure-JAX reference with dropout disabled.
    y0 = sublayer_connection(x, w, b, gamma, beta, seed, dropout_p=0.0)
    ref = _reference_no_dropout(x, w, b, gamma, beta)
    assert jnp.max(jnp.abs(y0 - ref)) < 2e-2

    # Full forward with train-mode dropout.
    y = sublayer_connection(x, w, b, gamma, beta, seed, dropout_p=dropout_p)
    jax.block_until_ready(y)
    assert y.shape == (B, S, C) and y.dtype == x.dtype
    print("KERNEL_OK")
</pallas_src>

<mosaic_0001>
module attributes {stable_mosaic.version = 11 : i64} {
  func.func @bn_stats_kernel(%arg0: i32, %arg1: memref<16x32xf32, #tpu.memory_space<vmem>>, %arg2: memref<1x32xf32, #tpu.memory_space<vmem>>, %arg3: memref<1x32xf32, #tpu.memory_space<vmem>>) attributes {dimension_semantics = [#tpu.dimension_semantics<arbitrary>], iteration_bounds = array<i64: 1>, scalar_prefetch = 0 : i64, scratch_operands = 0 : i64, tpu.core_type = #tpu.core_type<tc>, window_params = [{transform_indices = @transform_0, window_bounds = array<i64: 16, 32>}, {pipeline_mode = #tpu.pipeline_mode<synchronous>, transform_indices = @transform_1, window_bounds = array<i64: 1, 32>}, {pipeline_mode = #tpu.pipeline_mode<synchronous>, transform_indices = @transform_2, window_bounds = array<i64: 1, 32>}]} {
    %c0_i32 = arith.constant 0 : i32
    %0 = arith.cmpi eq, %arg0, %c0_i32 : i32
    %1 = arith.extui %0 : i1 to i32
    %c0_i32_0 = arith.constant 0 : i32
    %2 = arith.cmpi ne, %1, %c0_i32_0 : i32
    scf.if %2 {
      %cst_11 = arith.constant 0.000000e+00 : f32
      %15 = vector.broadcast %cst_11 : f32 to vector<1x32xf32>
      %c0_12 = arith.constant 0 : index
      %c0_13 = arith.constant 0 : index
      %16 = vector.load %arg2[%c0_12, %c0_13] : memref<1x32xf32, #tpu.memory_space<vmem>>, vector<1x32xf32>
      tpu.vector_store %arg2[%c0_12, %c0_13], %15 {strides = array<i32>} : memref<1x32xf32, #tpu.memory_space<vmem>>, vector<1x32xf32>,
      %cst_14 = arith.constant 0.000000e+00 : f32
      %17 = vector.broadcast %cst_14 : f32 to vector<1x32xf32>
      %c0_15 = arith.constant 0 : index
      %c0_16 = arith.constant 0 : index
      %18 = vector.load %arg3[%c0_15, %c0_16] : memref<1x32xf32, #tpu.memory_space<vmem>>, vector<1x32xf32>
      tpu.vector_store %arg3[%c0_15, %c0_16], %17 {strides = array<i32>} : memref<1x32xf32, #tpu.memory_space<vmem>>, vector<1x32xf32>,
    } else {
    }
    %c0 = arith.constant 0 : index
    %c0_1 = arith.constant 0 : index
    %3 = vector.load %arg1[%c0, %c0_1] : memref<16x32xf32, #tpu.memory_space<vmem>>, vector<16x32xf32>
    %c0_2 = arith.constant 0 : index
    %c0_3 = arith.constant 0 : index
    %4 = vector.load %arg2[%c0_2, %c0_3] : memref<1x32xf32, #tpu.memory_space<vmem>>, vector<1x32xf32>
    %cst = arith.constant dense<0.000000e+00> : vector<32xf32>
    %5 = vector.multi_reduction <add>, %3, %cst [0] : vector<16x32xf32> to vector<32xf32>
    %6 = vector.shape_cast %5 : vector<32xf32> to vector<1x32xf32>
    %7 = arith.addf %4, %6 : vector<1x32xf32>
    %c0_4 = arith.constant 0 : index
    %c0_5 = arith.constant 0 : index
    %8 = vector.load %arg2[%c0_4, %c0_5] : memref<1x32xf32, #tpu.memory_space<vmem>>, vector<1x32xf32>
    tpu.vector_store %arg2[%c0_4, %c0_5], %7 {strides = array<i32>} : memref<1x32xf32, #tpu.memory_space<vmem>>, vector<1x32xf32>,
    %c0_6 = arith.constant 0 : index
    %c0_7 = arith.constant 0 : index
    %9 = vector.load %arg3[%c0_6, %c0_7] : memref<1x32xf32, #tpu.memory_space<vmem>>, vector<1x32xf32>
    %10 = arith.mulf %3, %3 : vector<16x32xf32>
    %cst_8 = arith.constant dense<0.000000e+00> : vector<32xf32>
    %11 = vector.multi_reduction <add>, %10, %cst_8 [0] : vector<16x32xf32> to vector<32xf32>
    %12 = vector.shape_cast %11 : vector<32xf32> to vector<1x32xf32>
    %13 = arith.addf %9, %12 : vector<1x32xf32>
    %c0_9 = arith.constant 0 : index
    %c0_10 = arith.constant 0 : index
    %14 = vector.load %arg3[%c0_9, %c0_10] : memref<1x32xf32, #tpu.memory_space<vmem>>, vector<1x32xf32>
    tpu.vector_store %arg3[%c0_9, %c0_10], %13 {strides = array<i32>} : memref<1x32xf32, #tpu.memory_space<vmem>>, vector<1x32xf32>,
    return
  }
  func.func @transform_0(%arg0: i32) -> (i32, i32) {
    %c0_i32 = arith.constant 0 : i32
    %c0_i32_0 = arith.constant 0 : i32
    return %arg0, %c0_i32 : i32, i32
  }
  func.func @transform_1(%arg0: i32) -> (i32, i32) {
    %c0_i32 = arith.constant 0 : i32
    %c0_i32_0 = arith.constant 0 : i32
    %c0_i32_1 = arith.constant 0 : i32
    return %c0_i32, %c0_i32_0 : i32, i32
  }
  func.func @transform_2(%arg0: i32) -> (i32, i32) {
    %c0_i32 = arith.constant 0 : i32
    %c0_i32_0 = arith.constant 0 : i32
    %c0_i32_1 = arith.constant 0 : i32
    return %c0_i32, %c0_i32_0 : i32, i32
  }
}

</mosaic_0001>

<llo_original>
// kernel: tpu_custom_call.1
$region0: #{tpu_custom_call.1}
  #allocation0 [shape = 'u32[]', space=smem, size = 0x4, offset = 0x4, fixed_abs, tag = 'smem constant byte address 0x4 - core index']
  #allocation1 [shape = 'u32[144,128]{1,0:T(1,128)}', space=vmem, size = 0x12000, scoped, tag = 'internal scratch']
  %s0 = inlined_call_operand.hbm [shape: f32[16,32], index: 0, kind: input, shape index: {}]
  %s1 = inlined_call_operand.hbm [shape: f32[1,32], index: 1, kind: output, shape index: {0}]
  %s2 = inlined_call_operand.hbm [shape: f32[1,32], index: 2, kind: output, shape index: {1}]
  %3 = xla_tuple %s1, %s2
  %s4 = sld [smem:[#allocation0]]
  $region30: #{tpu_custom_call.1} parent=0
    _
  %s6 = ssub.s32 1, %s4
  %s7 = scalar_select 0, %s6, %s4
  $region1: #{tpu_custom_call.1} parent=0
    #allocation2 [shape = 'u8[8192]{0}', space=vmem, size = 0x2000, scoped, tag = 'input window, operand 0, single buffered']
    #allocation3 [shape = 's32[1]{0}', space=sflag, size = 0x4, scoped, tag = 'scoped memory for tpu_custom_call.1']
    #allocation4 [shape = 's32[1]{0}', space=sflag, size = 0x4, scoped, tag = 'scoped memory for tpu_custom_call.1']
    #allocation5 [shape = 'u8[512]{0}', space=vmem, size = 0x400, scoped, tag = 'output window, operand 0, single buffered']
    #allocation6 [shape = 'u8[512]{0}', space=vmem, size = 0x400, scoped, tag = 'output window, operand 1, single buffered']
    #allocation7 [shape = 's32[1]{0}', space=sflag, size = 0x4, scoped, tag = 'scoped memory for tpu_custom_call.1']
    %8 = vsyncpa [#allocation3], 0
    %9 = vsyncpa [#allocation4], 0
    %10 = vsyncpa [#allocation7], 0
    // Predicated region
    $region2: #{tpu_custom_call.1} parent=1 // pred_check
      _
    $region3: #{tpu_custom_call.1} parent=1 // pred_check_branch
      %12 = sbr.rel (0) target = $region5
    $region4: #{tpu_custom_call.1} parent=1 // pred_region
      %s14 = ssub.s32 256, 256
      %15 = vsyncadd [#allocation3], %s14
      %s16 = sshll.u32 [#allocation2], 4
      %s17 = int_to_ptr.vmem [resolvable:$true] %s16
      %22 = dma.hbm_to_vmem [thread:$0]  %s0, 256, %s17, [#allocation3], 128, 128, 8
    $region5: #{tpu_custom_call.1} parent=1 // pred_fallthru
      _
    // Predicated region
    $region6: #{tpu_custom_call.1} parent=1 // pred_check
      _
    $region7: #{tpu_custom_call.1} parent=1 // pred_check_branch
      %24 = sbr.rel (0) target = $region9
    $region8: #{tpu_custom_call.1} parent=1 // pred_region
      %25 = dma.done [#allocation3], 256
    $region9: #{tpu_custom_call.1} parent=1 // pred_fallthru
      _
    %p26 = scmp.eq.s32.totalorder 0, 0
    // Predicated region
    $region10: #{tpu_custom_call.1} parent=1 // pred_check
      %p27 = pneg %p26
    $region11: #{tpu_custom_call.1} parent=1 // pred_check_branch
      %29 = sbr.rel (%p27) target = $region13
    $region12: #{tpu_custom_call.1} parent=1 // pred_region
      %vm30 = vcmask 253952
      %31 = vst.msk [vmem:[#allocation5] sm:$0x1] %vm30, 0.0
      %32 = vst.msk [vmem:[#allocation6] sm:$0x1] %vm30, 0.0
    $region13: #{tpu_custom_call.1} parent=1 // pred_fallthru
      _
    %v33 = vld [vmem:[#allocation2] sm:$0xff]
    %v34 = vld [vmem:[#allocation2 + $0x8] sm:$0xff]
    %v35 = vld [vmem:[#allocation5] sm:$0x1]
    %vm36 = vcmask 261120
    %v37 = vsel %vm36, %v33, 0.0
    %v38 = vsel %vm36, %v34, 0.0
    %v39 = vadd.f32 %v37, %v38
    %v40 = vrot.slane %v39, 4
    %v41 = vadd.f32 %v39, %v40
    %v42 = vrot.slane %v41, 2
    %v43 = vadd.f32 %v41, %v42
    %v44 = vrot.slane %v43, 1
    %v45 = vadd.f32 %v43, %v44
    %v46 = vadd.f32 %v35, %v45
    %vm47 = vcmask 253952
    %48 = vst.msk [vmem:[#allocation5] sm:$0x1] %vm47, %v46
    %v49 = vld [vmem:[#allocation6] sm:$0x1]
    %v50 = vmul.f32 %v33, %v33
    %v51 = vmul.f32 %v34, %v34
    %v52 = vsel %vm36, %v50, 0.0
    %v53 = vsel %vm36, %v51, 0.0
    %v54 = vadd.f32 %v52, %v53
    %v55 = vrot.slane %v54, 4
    %v56 = vadd.f32 %v54, %v55
    %v57 = vrot.slane %v56, 2
    %v58 = vadd.f32 %v56, %v57
    %v59 = vrot.slane %v58, 1
    %v60 = vadd.f32 %v58, %v59
    %v61 = vadd.f32 %v49, %v60
    %62 = vst.msk [vmem:[#allocation6] sm:$0x1] %vm47, %v61
    // Predicated region
    $region14: #{tpu_custom_call.1} parent=1 // pred_check
      _
    $region15: #{tpu_custom_call.1} parent=1 // pred_check_branch
      %64 = sbr.rel (0) target = $region17
    $region16: #{tpu_custom_call.1} parent=1 // pred_region
      %s66 = ssub.s32 16, 16
      %67 = vsyncadd [#allocation4], %s66
      %s69 = sshll.u32 [#allocation5], 4
      %s70 = int_to_ptr.vmem [resolvable:$true] %s69
      %72 = dma.vmem_to_hbm [thread:$0]  %s70, 16, %s1, [#allocation4]
    $region17: #{tpu_custom_call.1} parent=1 // pred_fallthru
      _
    // Predicated region
    $region18: #{tpu_custom_call.1} parent=1 // pred_check
      _
    $region19: #{tpu_custom_call.1} parent=1 // pred_check_branch
      %74 = sbr.rel (0) target = $region21
    $region20: #{tpu_custom_call.1} parent=1 // pred_region
      %s76 = ssub.s32 16, 16
      %77 = vsyncadd [#allocation7], %s76
      %s79 = sshll.u32 [#allocation6], 4
      %s80 = int_to_ptr.vmem [resolvable:$true] %s79
      %82 = dma.vmem_to_hbm [thread:$0]  %s80, 16, %s2, [#allocation7]
    $region21: #{tpu_custom_call.1} parent=1 // pred_fallthru
      _
    // Predicated region
    $region22: #{tpu_custom_call.1} parent=1 // pred_check
      _
    $region23: #{tpu_custom_call.1} parent=1 // pred_check_branch
      %84 = sbr.rel (0) target = $region25
    $region24: #{tpu_custom_call.1} parent=1 // pred_region
      %85 = dma.done [#allocation4], 16
    $region25: #{tpu_custom_call.1} parent=1 // pred_fallthru
      _
    // Predicated region
    $region26: #{tpu_custom_call.1} parent=1 // pred_check
      _
    $region27: #{tpu_custom_call.1} parent=1 // pred_check_branch
      %87 = sbr.rel (0) target = $region29
    $region28: #{tpu_custom_call.1} parent=1 // pred_region
      %88 = dma.done [#allocation7], 16
    $region29: #{tpu_custom_call.1} parent=1 // pred_fallthru
      _
    %89 = vsyncpa [#allocation3], 1
    %90 = vsyncpa [#allocation4], 1
    %91 = vsyncpa [#allocation7], 1

</llo_original>
